<compile_context>
chip_gen: v5e
topology: v5e:2x2
jax: 0.10.0
libtpu: 0.0.40
codegen_flags: <defaults>
</compile_context>

<pallas_src>
import functools

import jax
import jax.numpy as jnp
from jax.experimental import pallas as pl
from jax.experimental.pallas import tpu as pltpu


# ---------------------------------------------------------------------------
# Kernel
# ---------------------------------------------------------------------------
def _sobel_kernel(x_ref, m_ref, o_ref, *, W, hw_pad):
    # x_ref: (B_TILE, HWp)      each row = one flattened (H, W) image (any float dtype)
    # m_ref: (8, HWp) f32       rows 0..3 = [top, bottom, left, right] border masks
    # o_ref: (B_TILE, 2*HWp)    lanes [0:HWp] = Gx, [HWp:2*HWp] = Gy
    x = x_ref[...].astype(jnp.float32)          # in-kernel cast: no wrapper HBM pass
    shape = x.shape

    # Hoist the sublane broadcasts once; reuse (no per-use broadcast_in_dim).
    m_top = jnp.broadcast_to(m_ref[0:1, :], shape)
    m_bot = jnp.broadcast_to(m_ref[1:2, :], shape)
    m_left = jnp.broadcast_to(m_ref[2:3, :], shape)
    m_right = jnp.broadcast_to(m_ref[3:4, :], shape)

    # Vertical neighbours via lane rolls; multiplicative zero-padding at the
    # top / bottom image rows (masks are 0/1 planes -> single vmul each).
    up = m_top * pltpu.roll(x, W, axis=1)             # x[i-1, j]
    dn = m_bot * pltpu.roll(x, hw_pad - W, axis=1)    # x[i+1, j]

    # Separable Sobel (shared between Gx and Gy).
    sv = up + 2.0 * x + dn        # vertical smooth [1, 2, 1]
    dv = up - dn                  # vertical diff   [1, 0, -1]

    # Horizontal neighbours via lane rolls; zero padding at left / right cols.
    sv_l = m_left * pltpu.roll(sv, 1, axis=1)              # sv[i, j-1]
    sv_r = m_right * pltpu.roll(sv, hw_pad - 1, axis=1)    # sv[i, j+1]
    dv_l = m_left * pltpu.roll(dv, 1, axis=1)
    dv_r = m_right * pltpu.roll(dv, hw_pad - 1, axis=1)

    # Lane-aligned, lane-dense stores (both offsets are multiples of 128).
    o_ref[:, 0:hw_pad] = sv_l - sv_r                    # Gx = diff_h(smooth_v)
    o_ref[:, hw_pad:2 * hw_pad] = dv_l + 2.0 * dv + dv_r  # Gy = smooth_h(diff_v)


# ---------------------------------------------------------------------------
# Host-side helpers
# ---------------------------------------------------------------------------
def _cdiv(a, b):
    return -(-a // b)


def _round_up(a, b):
    return _cdiv(a, b) * b


def _border_masks(H, W, hw_pad):
    """(8, hw_pad) f32: rows 0..3 = [top, bottom, left, right] 0/1 masks."""
    HW = H * W
    col = jnp.arange(hw_pad, dtype=jnp.int32)
    valid = col < HW
    jcol = col % W
    m_top = (col >= W) & valid
    m_bot = col < (HW - W)                 # pad lanes (>= HW) are 0 automatically
    m_left = (jcol != 0) & valid
    m_right = (jcol != W - 1) & valid
    m = jnp.stack([m_top, m_bot, m_left, m_right]).astype(jnp.float32)
    return jnp.concatenate([m, m], axis=0)  # pad to a full (8, lanes) sublane tile


def _choose_tiling(n, hw_pad, in_itemsize):
    """Pick (batch_tile, grid_steps): tile multiple of 8, even steps >= 2."""
    # f32 working set per image per step: double-buffered input + 2-channel
    # output blocks plus ~6 roll/mask temporaries.
    work_per_img = (2 * (in_itemsize + 2 * 4) + 6 * 4) * hw_pad
    vmem_budget = 40 << 20            # safe on v7x (64 MiB physical VMEM)
    blk_budget = 4 << 20              # keep the f32 input block <= ~4 MiB
    bt_cap = min(vmem_budget // max(1, work_per_img),
                 max(1, blk_budget // (hw_pad * 4)))
    bt_cap = max(8, (bt_cap // 8) * 8)
    # TODO(synk): for very large H*W where even bt=8 busts the v7x VMEM budget,
    # add a second grid axis over row bands (H_TILE*W lanes) with a 1-row halo.

    steps = max(2, _cdiv(n, bt_cap))
    if steps % 2:
        steps += 1
    bt = max(8, min(bt_cap, _round_up(_cdiv(n, steps), 8)))
    steps = max(2, _cdiv(n, bt))
    if steps % 2:
        steps += 1                    # even step count keeps both v7x TCs busy
    return bt, steps


def _vmem_limit_bytes():
    # 48 MiB is safe on every generation (v7x has 64 MiB physical); allow a
    # little more headroom on 128 MiB parts (v5e / v6e) when detectable.
    try:
        cap = pltpu.get_tpu_info().vmem_capacity_bytes
    except Exception:
        cap = 64 << 20
    return (64 << 20) if cap >= (100 << 20) else (48 << 20)


# ---------------------------------------------------------------------------
# Public entry point
# ---------------------------------------------------------------------------
def sobel(x):
    """x: (N, 1, H, W) float -> (N, 2, H, W) float32 (channel 0 = Gx, 1 = Gy)."""
    N, C, H, W = x.shape
    assert C == 1, "Sobel module expects a single input channel"
    HW = H * W
    HWp = _round_up(HW, 128)          # lane-align each flattened image

    xf = x.reshape(N, HW)             # free row-major view, original dtype
    itemsize = jnp.dtype(x.dtype).itemsize
    bt, steps = _choose_tiling(N, HWp, itemsize)
    n_pad = bt * steps
    if (n_pad, HWp) != (N, HW):
        xf = jnp.pad(xf, ((0, n_pad - N), (0, HWp - HW)))

    masks = _border_masks(H, W, HWp)  # (8, HWp) f32, DMA'd once (constant index)

    kernel = functools.partial(_sobel_kernel, W=W, hw_pad=HWp)

    out = pl.pallas_call(
        kernel,
        out_shape=jax.ShapeDtypeStruct((n_pad, 2 * HWp), jnp.float32),
        grid_spec=pltpu.PrefetchScalarGridSpec(
            num_scalar_prefetch=0,
            grid=(steps,),
            in_specs=[
                pl.BlockSpec((bt, HWp), lambda b: (b, 0)),
                pl.BlockSpec((8, HWp), lambda b: (0, 0)),
            ],
            out_specs=pl.BlockSpec((bt, 2 * HWp), lambda b: (b, 0)),
        ),
        compiler_params=pltpu.CompilerParams(
            dimension_semantics=("parallel",),
            vmem_limit_bytes=_vmem_limit_bytes(),
        ),
        cost_estimate=pl.CostEstimate(
            flops=12 * N * HW,
            bytes_accessed=int(N * HW * itemsize + 8 * N * HW),
            transcendentals=0,
        ),
    )(xf, masks)

    # (n_pad, 2*HWp) row-major -> (n_pad, 2, HWp); drop lane / batch padding.
    out = out.reshape(n_pad, 2, HWp)
    if HWp != HW:
        out = out[:, :, :HW]
    return out[:N].reshape(N, 2, H, W)


# ---------------------------------------------------------------------------
# Pure-JAX reference + self-check
# ---------------------------------------------------------------------------
def _sobel_ref(x):
    kx = jnp.array([[1.0, 0.0, -1.0], [2.0, 0.0, -2.0], [1.0, 0.0, -1.0]],
                   dtype=jnp.float32)
    ky = jnp.array([[1.0, 2.0, 1.0], [0.0, 0.0, 0.0], [-1.0, -2.0, -1.0]],
                   dtype=jnp.float32)
    w = jnp.stack([kx, ky])[:, None, :, :]  # (2, 1, 3, 3) OIHW
    return jax.lax.conv_general_dilated(
        x.astype(jnp.float32), w,
        window_strides=(1, 1), padding=((1, 1), (1, 1)),
        dimension_numbers=("NCHW", "OIHW", "NCHW"))


if __name__ == "__main__":
    key = jax.random.PRNGKey(0)
    N, C, H, W = 2, 1, 16, 16  # Sobel conv requires exactly 1 input channel
    x = jax.random.normal(key, (N, C, H, W), dtype=jnp.float32)

    out = jax.block_until_ready(sobel(x))

    ref = _sobel_ref(x)
    assert out.shape == (N, 2, H, W), out.shape
    assert jnp.allclose(out, ref, atol=1e-4, rtol=1e-4), \
        float(jnp.max(jnp.abs(out - ref)))

    print("KERNEL_OK")
</pallas_src>

<mosaic_0001>
module attributes {stable_mosaic.version = 11 : i64} {
  func.func @_sobel_kernel(%arg0: i32, %arg1: memref<8x256xf32, #tpu.memory_space<vmem>>, %arg2: memref<8x256xf32, #tpu.memory_space<vmem>>, %arg3: memref<8x512xf32, #tpu.memory_space<vmem>>) attributes {dimension_semantics = [#tpu.dimension_semantics<parallel>], iteration_bounds = array<i64: 2>, scalar_prefetch = 0 : i64, scratch_operands = 0 : i64, tpu.core_type = #tpu.core_type<tc>, window_params = [{transform_indices = @transform_0, window_bounds = array<i64: 8, 256>}, {pipeline_mode = #tpu.pipeline_mode<synchronous>, transform_indices = @transform_1, window_bounds = array<i64: 8, 256>}, {transform_indices = @transform_2, window_bounds = array<i64: 8, 512>}]} {
    %c0 = arith.constant 0 : index
    %c0_0 = arith.constant 0 : index
    %0 = vector.load %arg1[%c0, %c0_0] : memref<8x256xf32, #tpu.memory_space<vmem>>, vector<8x256xf32>
    %c0_1 = arith.constant 0 : index
    %c0_2 = arith.constant 0 : index
    %1 = vector.load %arg2[%c0_1, %c0_2] : memref<8x256xf32, #tpu.memory_space<vmem>>, vector<1x256xf32>
    %2 = vector.shape_cast %1 : vector<1x256xf32> to vector<1x256xf32>
    %3 = vector.broadcast %2 : vector<1x256xf32> to vector<8x256xf32>
    %c1 = arith.constant 1 : index
    %c0_3 = arith.constant 0 : index
    %4 = vector.load %arg2[%c1, %c0_3] : memref<8x256xf32, #tpu.memory_space<vmem>>, vector<1x256xf32>
    %5 = vector.shape_cast %4 : vector<1x256xf32> to vector<1x256xf32>
    %6 = vector.broadcast %5 : vector<1x256xf32> to vector<8x256xf32>
    %c2 = arith.constant 2 : index
    %c0_4 = arith.constant 0 : index
    %7 = vector.load %arg2[%c2, %c0_4] : memref<8x256xf32, #tpu.memory_space<vmem>>, vector<1x256xf32>
    %8 = vector.shape_cast %7 : vector<1x256xf32> to vector<1x256xf32>
    %9 = vector.broadcast %8 : vector<1x256xf32> to vector<8x256xf32>
    %c3 = arith.constant 3 : index
    %c0_5 = arith.constant 0 : index
    %10 = vector.load %arg2[%c3, %c0_5] : memref<8x256xf32, #tpu.memory_space<vmem>>, vector<1x256xf32>
    %11 = vector.shape_cast %10 : vector<1x256xf32> to vector<1x256xf32>
    %12 = vector.broadcast %11 : vector<1x256xf32> to vector<8x256xf32>
    %c16_i32 = arith.constant 16 : i32
    %13 = tpu.dynamic_rotate %0 by %c16_i32 dim 1 : vector<8x256xf32>, i32 -> vector<8x256xf32>
    %14 = arith.mulf %3, %13 : vector<8x256xf32>
    %c240_i32 = arith.constant 240 : i32
    %15 = tpu.dynamic_rotate %0 by %c240_i32 dim 1 : vector<8x256xf32>, i32 -> vector<8x256xf32>
    %16 = arith.mulf %6, %15 : vector<8x256xf32>
    %cst = arith.constant 2.000000e+00 : f32
    %17 = vector.broadcast %cst : f32 to vector<8x256xf32>
    %18 = arith.mulf %17, %0 : vector<8x256xf32>
    %19 = arith.addf %14, %18 : vector<8x256xf32>
    %20 = arith.addf %19, %16 : vector<8x256xf32>
    %21 = arith.subf %14, %16 : vector<8x256xf32>
    %c1_i32 = arith.constant 1 : i32
    %22 = tpu.dynamic_rotate %20 by %c1_i32 dim 1 : vector<8x256xf32>, i32 -> vector<8x256xf32>
    %23 = arith.mulf %9, %22 : vector<8x256xf32>
    %c255_i32 = arith.constant 255 : i32
    %24 = tpu.dynamic_rotate %20 by %c255_i32 dim 1 : vector<8x256xf32>, i32 -> vector<8x256xf32>
    %25 = arith.mulf %12, %24 : vector<8x256xf32>
    %c1_i32_6 = arith.constant 1 : i32
    %26 = tpu.dynamic_rotate %21 by %c1_i32_6 dim 1 : vector<8x256xf32>, i32 -> vector<8x256xf32>
    %27 = arith.mulf %9, %26 : vector<8x256xf32>
    %c255_i32_7 = arith.constant 255 : i32
    %28 = tpu.dynamic_rotate %21 by %c255_i32_7 dim 1 : vector<8x256xf32>, i32 -> vector<8x256xf32>
    %29 = arith.mulf %12, %28 : vector<8x256xf32>
    %30 = arith.subf %23, %25 : vector<8x256xf32>
    %c0_8 = arith.constant 0 : index
    %c0_9 = arith.constant 0 : index
    %31 = vector.load %arg3[%c0_8, %c0_9] : memref<8x512xf32, #tpu.memory_space<vmem>>, vector<8x256xf32>
    tpu.vector_store %arg3[%c0_8, %c0_9], %30 {strides = array<i32>} : memref<8x512xf32, #tpu.memory_space<vmem>>, vector<8x256xf32>,
    %cst_10 = arith.constant 2.000000e+00 : f32
    %32 = vector.broadcast %cst_10 : f32 to vector<8x256xf32>
    %33 = arith.mulf %32, %21 : vector<8x256xf32>
    %34 = arith.addf %27, %33 : vector<8x256xf32>
    %35 = arith.addf %34, %29 : vector<8x256xf32>
    %c0_11 = arith.constant 0 : index
    %c256 = arith.constant 256 : index
    %36 = vector.load %arg3[%c0_11, %c256] : memref<8x512xf32, #tpu.memory_space<vmem>>, vector<8x256xf32>
    tpu.vector_store %arg3[%c0_11, %c256], %35 {strides = array<i32>} : memref<8x512xf32, #tpu.memory_space<vmem>>, vector<8x256xf32>,
    return
  }
  func.func @transform_0(%arg0: i32) -> (i32, i32) {
    %c0_i32 = arith.constant 0 : i32
    %c0_i32_0 = arith.constant 0 : i32
    return %arg0, %c0_i32 : i32, i32
  }
  func.func @transform_1(%arg0: i32) -> (i32, i32) {
    %c0_i32 = arith.constant 0 : i32
    %c0_i32_0 = arith.constant 0 : i32
    %c0_i32_1 = arith.constant 0 : i32
    return %c0_i32, %c0_i32_0 : i32, i32
  }
  func.func @transform_2(%arg0: i32) -> (i32, i32) {
    %c0_i32 = arith.constant 0 : i32
    %c0_i32_0 = arith.constant 0 : i32
    return %arg0, %c0_i32 : i32, i32
  }
}

</mosaic_0001>

<llo_original>
// kernel: tpu_custom_call.1
$region0: #{tpu_custom_call.1}
  #allocation0 [shape = 'u32[]', space=smem, size = 0x4, offset = 0x4, fixed_abs, tag = 'smem constant byte address 0x4 - core index']
  #allocation1 [shape = 'u32[72,128]{1,0:T(1,128)}', space=vmem, size = 0x9000, scoped, tag = 'internal scratch']
  %s0 = inlined_call_operand.hbm [shape: f32[16,256], index: 0, kind: input, shape index: {}]
  %s1 = inlined_call_operand.hbm [shape: f32[8,256], index: 1, kind: input, shape index: {}]
  %s2 = inlined_call_operand.hbm [shape: f32[16,512], index: 2, kind: output, shape index: {}]
  %s3 = sld [smem:[#allocation0]]
  $region49: #{tpu_custom_call.1} parent=0
    _
  %s5 = ssub.s32 1, %s3
  %s6 = scalar_select 0, %s5, %s3
  $region1: #{tpu_custom_call.1} parent=0
    #allocation2 [shape = 'u8[16384]{0}', space=vmem, size = 0x4000, scoped, tag = 'input window, operand 0']
    #allocation3 [shape = 's32[2]{0}', space=sflag, size = 0x8, scoped, tag = 'scoped memory for tpu_custom_call.1']
    #allocation4 [shape = 's32[2]{0}', space=sflag, size = 0x8, scoped, tag = 'scoped memory for tpu_custom_call.1']
    #allocation5 [shape = 'u8[8192]{0}', space=vmem, size = 0x2000, scoped, tag = 'input window, operand 1, single buffered']
    #allocation6 [shape = 's32[1]{0}', space=sflag, size = 0x4, scoped, tag = 'scoped memory for tpu_custom_call.1']
    #allocation7 [shape = 'u8[32768]{0}', space=vmem, size = 0x8000, scoped, tag = 'output window, operand 0']
    %7 = vsyncpa [#allocation3], 0
    %s8 = scalar_lea.sflag [#allocation3], 1
    %9 = vsyncpa %s8, 0
    %10 = vsyncpa [#allocation6], 0
    %11 = vsyncpa [#allocation4], 0
    %s12 = scalar_lea.sflag [#allocation4], 1
    %13 = vsyncpa %s12, 0
    loop: start=0, step=1, limit=4
    $region2: #{tpu_custom_call.1} parent=1 // loop_pre_header
      _
    $region3: #{tpu_custom_call.1} parent=1 // loop_header
      %s15 = sphi 0, %s19
      %p16 = scmp.ge.s32.totalorder %s15, 4
      %s25 = sphi 0, %s27
      %s28 = sphi 0, %s25
      %s29 = sphi 0, %s28
      %s45 = sphi 0, %s29
      %s49 = sphi 0, %s49
      %s51 = sphi 0, %s49
      %s52 = sphi 0, %s51
      %s66 = sphi 0, %s52
      %s72 = sphi 0, %s74
      %s75 = sphi 0, %s72
      %s76 = sphi 0, %s75
      %s92 = sphi 0, %s76
    $region4: #{tpu_custom_call.1} parent=1 // loop_header_branch
      %18 = sbr.rel (%p16) target = $region8
    $region5: #{tpu_custom_call.1} parent=1 // loop_body
      %s20 = ssub.s32 %s15, 1
      %s21 = ssub.s32 %s15, 2
      %s22 = sadd.s32 %s15, 1
      %s23 = ssub.s32 %s15, %s22
      %p24 = scmp.eq.s32.totalorder %s23, 0
      %s26 = sadd.s32 %s25, 1
      %s27 = scalar_select %p24, %s25, %s26
      %p30 = pneg %p24
      %p31 = scmp.eq.s32.totalorder %s15, 1
      %p32 = por %p30, %p31
      %p33 = scmp.ne.s32.totalorder %s25, %s28
      %p34 = scmp.eq.s32.totalorder %s15, 0
      %p35 = por %p33, %p34
      %p36 = scmp.ne.s32.totalorder %s25, %s28
      %p37 = scmp.eq.s32.totalorder %s20, 1
      %p38 = por %p36, %p37
      %p39 = scmp.ne.s32.totalorder %s28, %s29
      %p40 = scmp.eq.s32.totalorder %s20, 0
      %p41 = por %p39, %p40
      %p42 = scmp.ne.s32.totalorder %s28, %s29
      %p43 = scmp.eq.s32.totalorder %s21, 1
      %p44 = por %p42, %p43
      %p46 = scmp.ne.s32.totalorder %s29, %s45
      %p47 = scmp.eq.s32.totalorder %s21, 0
      %p48 = por %p46, %p47
      %s50 = sadd.s32 %s49, 1
      %p53 = scmp.eq.s32.totalorder %s15, 1
      %p54 = scmp.ne.s32.totalorder %s49, %s51
      %p55 = scmp.eq.s32.totalorder %s15, 0
      %p56 = por %p54, %p55
      %p57 = scmp.ne.s32.totalorder %s49, %s51
      %p58 = scmp.eq.s32.totalorder %s20, 1
      %p59 = por %p57, %p58
      %p60 = scmp.ne.s32.totalorder %s51, %s52
      %p61 = scmp.eq.s32.totalorder %s20, 0
      %p62 = por %p60, %p61
      %p63 = scmp.ne.s32.totalorder %s51, %s52
      %p64 = scmp.eq.s32.totalorder %s21, 1
      %p65 = por %p63, %p64
      %p67 = scmp.ne.s32.totalorder %s52, %s66
      %p68 = scmp.eq.s32.totalorder %s21, 0
      %p69 = por %p67, %p68
      %s70 = ssub.s32 %s15, %s22
      %p71 = scmp.eq.s32.totalorder %s70, 0
      %s73 = sadd.s32 %s72, 1
      %s74 = scalar_select %p71, %s72, %s73
      %p77 = pneg %p71
      %p78 = scmp.eq.s32.totalorder %s15, 1
      %p79 = por %p77, %p78
      %p80 = scmp.ne.s32.totalorder %s72, %s75
      %p81 = scmp.eq.s32.totalorder %s15, 0
      %p82 = por %p80, %p81
      %p83 = scmp.ne.s32.totalorder %s72, %s75
      %p84 = scmp.eq.s32.totalorder %s20, 1
      %p85 = por %p83, %p84
      %p86 = scmp.ne.s32.totalorder %s75, %s76
      %p87 = scmp.eq.s32.totalorder %s20, 0
      %p88 = por %p86, %p87
      %p89 = scmp.ne.s32.totalorder %s75, %s76
      %p90 = scmp.eq.s32.totalorder %s21, 1
      %p91 = por %p89, %p90
      %p93 = scmp.ne.s32.totalorder %s76, %s92
      %p94 = scmp.eq.s32.totalorder %s21, 0
      %p95 = por %p93, %p94
      %p96 = scmp.le.s32.totalorder 1, %s15
      %p97 = scmp.lt.s32.totalorder %s15, 3
      %p98 = pnand %p96, %p97
      %p99 = pneg %p98
      // Predicated region
      $region9: #{tpu_custom_call.1} parent=5 // pred_check
        _
      $region10: #{tpu_custom_call.1} parent=5 // pred_check_branch
        %101 = sbr.rel (%p98) target = $region12
      $region11: #{tpu_custom_call.1} parent=5 // pred_region
        %s102 = ssub.s32 %s15, 1
        // Predicated region
        $region13: #{tpu_custom_call.1} parent=11 // pred_check
          %p103 = pneg %p62
        $region14: #{tpu_custom_call.1} parent=11 // pred_check_branch
          %105 = sbr.rel (%p103) target = $region16
        $region15: #{tpu_custom_call.1} parent=11 // pred_region
          %107 = vsyncadd [#allocation6], 0
          %s109 = sshll.u32 %s1, 4
          %s110 = int_to_ptr.hbm [resolvable:$true] %s109
          %s111 = sshll.u32 [#allocation5], 4
          %s112 = int_to_ptr.vmem [resolvable:$true] %s111
          %114 = dma.hbm_to_vmem [thread:$0]  %s110, 256, %s112, [#allocation6]
        $region16: #{tpu_custom_call.1} parent=11 // pred_fallthru
          _
      $region12: #{tpu_custom_call.1} parent=5 // pred_fallthru
        _
      %p115 = scmp.lt.s32.totalorder %s15, 2
      // Predicated region
      $region17: #{tpu_custom_call.1} parent=5 // pred_check
        %p116 = pneg %p115
      $region18: #{tpu_custom_call.1} parent=5 // pred_check_branch
        %118 = sbr.rel (%p116) target = $region20
      $region19: #{tpu_custom_call.1} parent=5 // pred_region
        // Predicated region
        $region21: #{tpu_custom_call.1} parent=19 // pred_check
          %p119 = pneg %p35
        $region22: #{tpu_custom_call.1} parent=19 // pred_check_branch
          %121 = sbr.rel (%p119) target = $region24
        $region23: #{tpu_custom_call.1} parent=19 // pred_region
          %s122 = sand.u32 %s25, 1
          %s123 = scalar_lea.sflag [#allocation3], %s122
          %s124 = sand.u32 %s25, 1
          %s125 = smul.addr %s124, 16
          %s126 = scalar_lea.vmem [#allocation2], %s125
          %128 = vsyncadd %s123, 0
          %s129 = smul.addr %s15, 2
          %s130 = smul.addr %s129, 8
          %s131 = scalar_lea.hbm %s0, %s130
          %s133 = sshll.u32 %s131, 4
          %s134 = int_to_ptr.hbm [resolvable:$true] %s133
          %s135 = sshll.u32 %s126, 4
          %s136 = int_to_ptr.vmem [resolvable:$true] %s135
          %138 = dma.hbm_to_vmem [thread:$0]  %s134, 256, %s136, %s123
        $region24: #{tpu_custom_call.1} parent=19 // pred_fallthru
          _
      $region20: #{tpu_custom_call.1} parent=5 // pred_fallthru
        _
      %p139 = scmp.le.s32.totalorder 1, %s15
      %p140 = scmp.lt.s32.totalorder %s15, 3
      %p141 = pnand %p139, %p140
      %p142 = pneg %p141
      // Predicated region
      $region25: #{tpu_custom_call.1} parent=5 // pred_check
        _
      $region26: #{tpu_custom_call.1} parent=5 // pred_check_branch
        %144 = sbr.rel (%p141) target = $region28
      $region27: #{tpu_custom_call.1} parent=5 // pred_region
        %s145 = ssub.s32 %s15, 1
        %s146 = sand.u32 %s28, 1
        %s147 = scalar_lea.sflag [#allocation3], %s146
        %s148 = sand.u32 %s28, 1
        %s149 = smul.addr %s148, 16
        %s150 = scalar_lea.vmem [#allocation2], %s149
        // Predicated region
        $region29: #{tpu_custom_call.1} parent=27 // pred_check
          %p151 = pneg %p41
        $region30: #{tpu_custom_call.1} parent=27 // pred_check_branch
          %153 = sbr.rel (%p151) target = $region32
        $region31: #{tpu_custom_call.1} parent=27 // pred_region
          %155 = dma.done %s147, 256
        $region32: #{tpu_custom_call.1} parent=27 // pred_fallthru
          _
        // Predicated region
        $region33: #{tpu_custom_call.1} parent=27 // pred_check
          %p156 = pneg %p62
        $region34: #{tpu_custom_call.1} parent=27 // pred_check_branch
          %158 = sbr.rel (%p156) target = $region36
        $region35: #{tpu_custom_call.1} parent=27 // pred_region
          %160 = dma.done [#allocation6], 256
        $region36: #{tpu_custom_call.1} parent=27 // pred_fallthru
          _
        %s161 = sand.u32 %s28, 1
        %s162 = scalar_lea.sflag [#allocation3], %s161
        %s163 = sand.u32 %s28, 1
        %s164 = smul.addr %s163, 16
        %s165 = scalar_lea.vmem [#allocation2], %s164
        %p166 = pneg %p41
        %p167 = pneg %p38
        %p168 = pneg %p62
        %p169 = pneg %p59
        %p170 = pneg %p88
        %p171 = pneg %p85
        %s172 = sand.u32 %s75, 1
        %s173 = scalar_lea.sflag [#allocation4], %s172
        %s174 = sand.u32 %s75, 1
        %s175 = smul.addr %s174, 32
        %s176 = scalar_lea.vmem [#allocation7], %s175
        %v177 = vld [vmem:[%s150] sm:$0xff]
        %v178 = vld [vmem:[%s150 + $0x8] sm:$0xff]
        %v179 = vld [vmem:[#allocation5] ss:$8 sm:$0x3]
        %v181 = vperm.slane %v179, 0
        %v182 = vperm.slane %v179, 1
        %s185 = scalar_lea.vmem [#allocation5], 1
        %v186 = vld [vmem:[%s185] ss:$8 sm:$0x3]
        %v188 = vperm.slane %v186, 0
        %v189 = vperm.slane %v186, 1
        %s192 = scalar_lea.vmem [#allocation5], 2
        %v193 = vld [vmem:[%s192] ss:$8 sm:$0x3]
        %v195 = vperm.slane %v193, 0
        %v196 = vperm.slane %v193, 1
        %s199 = scalar_lea.vmem [#allocation5], 3
        %v200 = vld [vmem:[%s199] ss:$8 sm:$0x3]
        %v202 = vperm.slane %v200, 0
        %v203 = vperm.slane %v200, 1
        %206 = vrot.lane.b32.xlu0 %v177, 16
        %v207 = vpop.permute.xlu0 %206
        %208 = vrot.lane.b32.xlu0 %v178, 16
        %v209 = vpop.permute.xlu0 %208
        %v210 = vlaneseq
        %v211 = vand.u32 %v210, 127
        %vm212 = vcmp.lt.s32.totalorder %v211, 16
        %v213 = vsel %vm212, %v207, %v209
        %v214 = vsel %vm212, %v209, %v207
        %v215 = vmul.f32 %v181, %v214
        %v216 = vmul.f32 %v182, %v213
        %217 = vrot.lane.b32.xlu0 %v177, 112
        %v218 = vpop.permute.xlu0 %217
        %219 = vrot.lane.b32.xlu0 %v178, 112
        %v220 = vpop.permute.xlu0 %219
        %vm221 = vcmp.lt.s32.totalorder %v211, 112
        %v222 = vsel %vm221, %v218, %v220
        %v223 = vsel %vm221, %v220, %v218
        %v224 = vmul.f32 %v188, %v222
        %v225 = vmul.f32 %v189, %v223
        %v226 = vmul.f32 %v177, 2.0
        %v227 = vmul.f32 %v178, 2.0
        %v228 = vadd.f32 %v215, %v226
        %v229 = vadd.f32 %v216, %v227
        %v230 = vadd.f32 %v228, %v224
        %v231 = vadd.f32 %v229, %v225
        %v232 = vsub.f32 %v215, %v224
        %v233 = vsub.f32 %v216, %v225
        %234 = vrot.lane.b32.xlu0 %v230, 1
        %v235 = vpop.permute.xlu0 %234
        %236 = vrot.lane.b32.xlu0 %v231, 1
        %v237 = vpop.permute.xlu0 %236
        %vm238 = vcmp.lt.s32.totalorder %v211, 1
        %v239 = vsel %vm238, %v235, %v237
        %v240 = vsel %vm238, %v237, %v235
        %v241 = vmul.f32 %v195, %v240
        %v242 = vmul.f32 %v196, %v239
        %243 = vrot.lane.b32.xlu0 %v230, 127
        %v244 = vpop.permute.xlu0 %243
        %245 = vrot.lane.b32.xlu0 %v231, 127
        %v246 = vpop.permute.xlu0 %245
        %vm247 = vcmp.lt.s32.totalorder %v211, 127
        %v248 = vsel %vm247, %v244, %v246
        %v249 = vsel %vm247, %v246, %v244
        %v250 = vmul.f32 %v202, %v248
        %v251 = vmul.f32 %v203, %v249
        %252 = vrot.lane.b32.xlu0 %v232, 1
        %v253 = vpop.permute.xlu0 %252
        %254 = vrot.lane.b32.xlu0 %v233, 1
        %v255 = vpop.permute.xlu0 %254
        %v256 = vsel %vm238, %v253, %v255
        %v257 = vsel %vm238, %v255, %v253
        %v258 = vmul.f32 %v195, %v257
        %v259 = vmul.f32 %v196, %v256
        %260 = vrot.lane.b32.xlu0 %v232, 127
        %v261 = vpop.permute.xlu0 %260
        %262 = vrot.lane.b32.xlu0 %v233, 127
        %v263 = vpop.permute.xlu0 %262
        %v264 = vsel %vm247, %v261, %v263
        %v265 = vsel %vm247, %v263, %v261
        %v266 = vmul.f32 %v202, %v264
        %v267 = vmul.f32 %v203, %v265
        %v268 = vsub.f32 %v241, %v250
        %v269 = vsub.f32 %v242, %v251
        %270 = vst [vmem:[%s176] sm:$0xff] %v268
        %271 = vst [vmem:[%s176 + $0x8] sm:$0xff] %v269
        %v272 = vmul.f32 %v232, 2.0
        %v273 = vmul.f32 %v233, 2.0
        %v274 = vadd.f32 %v258, %v272
        %v275 = vadd.f32 %v259, %v273
        %v276 = vadd.f32 %v274, %v266
        %v277 = vadd.f32 %v275, %v267
        %278 = vst [vmem:[%s176 + $0x10] sm:$0xff] %v276
        %279 = vst [vmem:[%s176 + $0x18] sm:$0xff] %v277
        %s280 = sand.u32 %s75, 1
        %s281 = scalar_lea.sflag [#allocation4], %s280
        %s282 = sand.u32 %s75, 1
        %s283 = smul.addr %s282, 32
        %s284 = scalar_lea.vmem [#allocation7], %s283
        // Predicated region
        $region37: #{tpu_custom_call.1} parent=27 // pred_check
          %p285 = pneg %p85
        $region38: #{tpu_custom_call.1} parent=27 // pred_check_branch
          %287 = sbr.rel (%p285) target = $region40
        $region39: #{tpu_custom_call.1} parent=27 // pred_region
          %289 = vsyncadd %s281, 0
          %s290 = smul.addr %s20, 4
          %s291 = smul.addr %s290, 8
          %s292 = scalar_lea.hbm %s2, %s291
          %s294 = sshll.u32 %s284, 4
          %s295 = int_to_ptr.vmem [resolvable:$true] %s294
          %s296 = sshll.u32 %s292, 4
          %s297 = int_to_ptr.hbm [resolvable:$true] %s296
          %299 = dma.vmem_to_hbm [thread:$0]  %s295, 512, %s297, %s281
        $region40: #{tpu_custom_call.1} parent=27 // pred_fallthru
          _
      $region28: #{tpu_custom_call.1} parent=5 // pred_fallthru
        _
      %p300 = scmp.le.s32.totalorder 2, %s15
      // Predicated region
      $region41: #{tpu_custom_call.1} parent=5 // pred_check
        %p301 = pneg %p300
      $region42: #{tpu_custom_call.1} parent=5 // pred_check_branch
        %303 = sbr.rel (%p301) target = $region44
      $region43: #{tpu_custom_call.1} parent=5 // pred_region
        %s304 = ssub.s32 %s15, 2
        // Predicated region
        $region45: #{tpu_custom_call.1} parent=43 // pred_check
          %p305 = pneg %p91
        $region46: #{tpu_custom_call.1} parent=43 // pred_check_branch
          %307 = sbr.rel (%p305) target = $region48
        $region47: #{tpu_custom_call.1} parent=43 // pred_region
          %s308 = sand.u32 %s76, 1
          %s309 = scalar_lea.sflag [#allocation4], %s308
          %s310 = sand.u32 %s76, 1
          %s311 = smul.addr %s310, 32
          %s312 = scalar_lea.vmem [#allocation7], %s311
          %314 = dma.done %s309, 512
        $region48: #{tpu_custom_call.1} parent=43 // pred_fallthru
          _
      $region44: #{tpu_custom_call.1} parent=5 // pred_fallthru
        _
    $region6: #{tpu_custom_call.1} parent=1 // loop_footer
      %s19 = sadd.s32 1, %s15
    $region7: #{tpu_custom_call.1} parent=1 // loop_footer_branch
      %14 = sbr.rel target = $region3
    $region8: #{tpu_custom_call.1} parent=1 // loop_exit
      _
    %315 = vsyncpa [#allocation3], 1
    %s316 = scalar_lea.sflag [#allocation3], 1
    %317 = vsyncpa %s316, 1
    %318 = vsyncpa [#allocation6], 1
    %319 = vsyncpa [#allocation4], 1
    %s320 = scalar_lea.sflag [#allocation4], 1
    %321 = vsyncpa %s320, 1

</llo_original>
